<compile_context>
chip_gen: v6e
topology: v6e:2x2x1
jax: 0.10.0
libtpu: 0.0.40
codegen_flags: <defaults>
</compile_context>

<pallas_src>
import jax
import jax.numpy as jnp
from jax.experimental import pallas as pl
from jax.experimental.pallas import tpu as pltpu


def _routing_kernel(x_ref, w_ref, b_ref, o_ref):
    # x_ref: (1, C)  flattened input, original dtype
    # w_ref: (E, C)  Linear weight, native torch layout (lane-dense over C)
    # b_ref: (E, 1)  Linear bias
    # o_ref: (E, 1)  sigmoid(W @ x + b), f32
    x = x_ref[...].astype(jnp.float32)          # (1, C) in-register widen
    w = w_ref[...].astype(jnp.float32)          # (E, C)
    # VPU multiply with sublane broadcast of x, XLU lane-reduce over C.
    logits = jnp.sum(w * x, axis=-1, keepdims=True)        # (E, 1) f32
    logits = logits + b_ref[...].astype(jnp.float32)
    o_ref[...] = jax.nn.sigmoid(logits).astype(o_ref.dtype)


def routing_forward(x, weight, bias):
    """Pallas implementation of _routing.forward (inference mode).

    x      : any shape with x.size == in_channels (torch.flatten collapses it)
    weight : (num_experts, in_channels)  -- native torch nn.Linear weight layout
    bias   : (num_experts,)
    returns: (num_experts,) float32 routing weights
    """
    num_experts, in_channels = weight.shape
    if x.size != in_channels:
        raise ValueError(
            f"_routing expects flatten(x) to have {in_channels} elements, "
            f"got {x.size} (x.shape={x.shape})")

    # Metadata-only reshapes (no dtype casts, no weight transpose).
    x_flat = jnp.reshape(x, (1, in_channels))
    b_col = jnp.reshape(bias, (num_experts, 1))

    itemsize = lambda a: jnp.dtype(a.dtype).itemsize
    cost = pl.CostEstimate(
        flops=2 * num_experts * in_channels + 4 * num_experts,
        transcendentals=num_experts,
        bytes_accessed=(x_flat.size * itemsize(x_flat)
                        + weight.size * itemsize(weight)
                        + bias.size * itemsize(bias)
                        + num_experts * 4),
    )

    out = pl.pallas_call(
        _routing_kernel,
        out_shape=jax.ShapeDtypeStruct((num_experts, 1), jnp.float32),
        in_specs=[
            pl.BlockSpec(memory_space=pltpu.MemorySpace.VMEM),  # x (1, C)
            pl.BlockSpec(memory_space=pltpu.MemorySpace.VMEM),  # W (E, C)
            pl.BlockSpec(memory_space=pltpu.MemorySpace.VMEM),  # b (E, 1)
        ],
        out_specs=pl.BlockSpec(memory_space=pltpu.MemorySpace.VMEM),
        cost_estimate=cost,
    )(x_flat, weight, b_col)

    return out[:, 0]  # (num_experts,)


if __name__ == "__main__":
    # Globally-pooled feature map of 16 channels routed over 8 experts.
    in_channels = 16
    num_experts = 8

    key = jax.random.PRNGKey(0)
    kx, kw, kb = jax.random.split(key, 3)

    # NCHW input that flattens to exactly `in_channels` elements.
    x = jax.random.normal(kx, (1, in_channels, 1, 1), dtype=jnp.float32)

    # Deterministic Linear params (torch-style uniform(-bound, bound) init).
    bound = 1.0 / jnp.sqrt(jnp.float32(in_channels))
    weight = jax.random.uniform(
        kw, (num_experts, in_channels), minval=-bound, maxval=bound,
        dtype=jnp.float32)
    bias = jax.random.uniform(
        kb, (num_experts,), minval=-bound, maxval=bound, dtype=jnp.float32)

    out = routing_forward(x, weight, bias)
    out = jax.block_until_ready(out)

    # Reference check in plain JAX (same multiply-reduce order as the kernel,
    # full f32 precision).
    x_vec = jnp.reshape(x, (1, in_channels))
    ref = jax.nn.sigmoid(jnp.sum(weight * x_vec, axis=-1) + bias)
    assert out.shape == (num_experts,)
    assert jnp.allclose(out, ref, atol=1e-6, rtol=1e-6)

    print("KERNEL_OK")
</pallas_src>

<mosaic_0001>
module attributes {stable_mosaic.version = 11 : i64} {
  func.func @_routing_kernel(%arg0: memref<1x16xf32, #tpu.memory_space<vmem>>, %arg1: memref<8x16xf32, #tpu.memory_space<vmem>>, %arg2: memref<8x1xf32, #tpu.memory_space<vmem>>, %arg3: memref<8x1xf32, #tpu.memory_space<vmem>>) attributes {dimension_semantics = [], scalar_prefetch = 0 : i64, scratch_operands = 0 : i64, tpu.core_type = #tpu.core_type<tc>} {
    %c0 = arith.constant 0 : index
    %c0_0 = arith.constant 0 : index
    %0 = vector.load %arg0[%c0, %c0_0] : memref<1x16xf32, #tpu.memory_space<vmem>>, vector<1x16xf32>
    %c0_1 = arith.constant 0 : index
    %c0_2 = arith.constant 0 : index
    %1 = vector.load %arg1[%c0_1, %c0_2] : memref<8x16xf32, #tpu.memory_space<vmem>>, vector<8x16xf32>
    %2 = vector.broadcast %0 : vector<1x16xf32> to vector<8x16xf32>
    %3 = arith.mulf %1, %2 : vector<8x16xf32>
    %cst = arith.constant dense<0.000000e+00> : vector<8xf32>
    %4 = vector.multi_reduction <add>, %3, %cst [1] : vector<8x16xf32> to vector<8xf32>
    %5 = vector.shape_cast %4 : vector<8xf32> to vector<8x1xf32>
    %c0_3 = arith.constant 0 : index
    %c0_4 = arith.constant 0 : index
    %6 = vector.load %arg2[%c0_3, %c0_4] : memref<8x1xf32, #tpu.memory_space<vmem>>, vector<8x1xf32>
    %7 = arith.addf %5, %6 : vector<8x1xf32>
    %8 = arith.negf %7 : vector<8x1xf32>
    %9 = math.exp %8 : vector<8x1xf32>
    %cst_5 = arith.constant 1.000000e+00 : f32
    %10 = vector.broadcast %cst_5 : f32 to vector<8x1xf32>
    %11 = arith.addf %10, %9 : vector<8x1xf32>
    %12 = arith.divf %10, %11 : vector<8x1xf32>
    %c0_6 = arith.constant 0 : index
    %c0_7 = arith.constant 0 : index
    %13 = vector.load %arg3[%c0_6, %c0_7] : memref<8x1xf32, #tpu.memory_space<vmem>>, vector<8x1xf32>
    tpu.vector_store %arg3[%c0_6, %c0_7], %12 {strides = array<i32>} : memref<8x1xf32, #tpu.memory_space<vmem>>, vector<8x1xf32>,
    return
  }
}

</mosaic_0001>

<llo_original>
// kernel: tpu_custom_call.1
$region0: #{tpu_custom_call.1}
  #allocation0 [shape = 'u32[]', space=smem, size = 0x4, offset = 0x4, fixed_abs, tag = 'smem constant byte address 0x4 - core index']
  #allocation1 [shape = 'u32[144,128]{1,0:T(1,128)}', space=vmem, size = 0x12000, scoped, tag = 'internal scratch']
  %s0 = inlined_call_operand.vmem [shape: f32[1,16], index: 0, kind: input, shape index: {}]
  %s1 = inlined_call_operand.vmem [shape: f32[8,16], index: 1, kind: input, shape index: {}]
  %s2 = inlined_call_operand.vmem [shape: f32[8,1], index: 2, kind: input, shape index: {}]
  %s3 = inlined_call_operand.vmem [shape: f32[8,1], index: 3, kind: output, shape index: {}]
  %s4 = sld [smem:[#allocation0]]
  $region22: #{tpu_custom_call.1} parent=0
    _
  %s6 = ssub.s32 1, %s4
  %s7 = scalar_select 0, %s6, %s4
  // Predicated region
  $region2: #{tpu_custom_call.1} parent=0 // pred_check
    _
  $region3: #{tpu_custom_call.1} parent=0 // pred_check_branch
    %9 = sbr.rel (0) target = $region5
  $region4: #{tpu_custom_call.1} parent=0 // pred_region
    _
  $region5: #{tpu_custom_call.1} parent=0 // pred_fallthru
    _
  // Predicated region
  $region6: #{tpu_custom_call.1} parent=0 // pred_check
    _
  $region7: #{tpu_custom_call.1} parent=0 // pred_check_branch
    %11 = sbr.rel (0) target = $region9
  $region8: #{tpu_custom_call.1} parent=0 // pred_region
    _
  $region9: #{tpu_custom_call.1} parent=0 // pred_fallthru
    _
  // Predicated region
  $region10: #{tpu_custom_call.1} parent=0 // pred_check
    _
  $region11: #{tpu_custom_call.1} parent=0 // pred_check_branch
    %13 = sbr.rel (0) target = $region13
  $region12: #{tpu_custom_call.1} parent=0 // pred_region
    _
  $region13: #{tpu_custom_call.1} parent=0 // pred_fallthru
    _
  %v14 = vld [vmem:[%s0] sm:$0x1]
  %v15 = vld [vmem:[%s1] sm:$0xff]
  %v17 = vlaneseq
  %v18 = vshrl.u32 %v17, 7
  %v19 = vsub.s32 0, %v18
  %v20 = vrot.slane %v14, %v19
  %v22 = vmul.f32 %v15, %v20
  %vm23 = vcmask 130048
  %v24 = vsel %vm23, %v22, 0.0
  %25 = vadd.xlane.f32.xlu0 %v24
  %v26 = vpop.xlane.xlu0 %25
  %v27 = vld [vmem:[%s2] sm:$0xff]
  %v28 = vadd.f32 %v26, %v27
  %v29 = vxor.u32 %v28, 2147483648
  %v30 = vmul.f32 %v29, 1.442695
  %v31 = vpow.pop %v30
  %v32 = vadd.f32 %v31, 1.0
  %v33 = vrcp.pop %v32
  %v34 = vmul.f32 1.0, %v33
  %vm35 = vcmask 7168
  %36 = vst.msk [vmem:[%s3] sm:$0xff] %vm35, %v34
  // Predicated region
  $region14: #{tpu_custom_call.1} parent=0 // pred_check
    _
  $region15: #{tpu_custom_call.1} parent=0 // pred_check_branch
    %38 = sbr.rel (0) target = $region17
  $region16: #{tpu_custom_call.1} parent=0 // pred_region
    _
  $region17: #{tpu_custom_call.1} parent=0 // pred_fallthru
    _
  // Predicated region
  $region18: #{tpu_custom_call.1} parent=0 // pred_check
    _
  $region19: #{tpu_custom_call.1} parent=0 // pred_check_branch
    %40 = sbr.rel (0) target = $region21
  $region20: #{tpu_custom_call.1} parent=0 // pred_region
    _
  $region21: #{tpu_custom_call.1} parent=0 // pred_fallthru
    _

</llo_original>
